<compile_context>
chip_gen: v7x
topology: tpu7x:2x2x1
jax: 0.10.0
libtpu: 0.0.40
codegen_flags: <defaults>
</compile_context>

<pallas_src>
import functools

import jax
import jax.numpy as jnp
from jax.experimental import pallas as pl
from jax.experimental.pallas import tpu as pltpu


# ----------------------------- helpers --------------------------------------

def _round_up(x, m):
    return ((x + m - 1) // m) * m


def _layernorm(x, gamma, beta, eps=1e-5):
    mu = jnp.mean(x, axis=-1, keepdims=True)
    var = jnp.mean((x - mu) ** 2, axis=-1, keepdims=True)
    return (x - mu) * jax.lax.rsqrt(var + eps) * gamma + beta


def _vmem_capacity_bytes():
    try:
        return int(pltpu.get_tpu_info().vmem_capacity_bytes)
    except Exception:
        return 128 << 20  # v5e/v6e default; v7x has 64 MiB


def _vmem_limit(blocks):
    """blocks: iterable of (shape, dtype). 2x for double-buffering + headroom,
    capped generation-aware at 75% of physical VMEM (≈48 MiB on v7x, ≈96 MiB
    on v5e/v6e)."""
    total = 0
    for shape, dtype in blocks:
        n = 1
        for d in shape:
            n *= int(d)
        total += n * jnp.dtype(dtype).itemsize
    cap = int(0.75 * _vmem_capacity_bytes())
    return int(min(max(2 * total + (8 << 20), 16 << 20), cap))


def _const_spec(shape, buffered):
    """BlockSpec for a grid-invariant operand (block index never changes).
    When `buffered`, request single buffering so big weights are not held
    twice in VMEM (matters for ViT-B/L on v7x's 64 MiB VMEM)."""
    nd = len(shape)
    idx = lambda i, _nd=nd: (0,) * _nd
    if buffered:
        return pl.BlockSpec(shape, idx, pipeline_mode=pl.Buffered(1))
    return pl.BlockSpec(shape, idx)


# --------------------------- patch embedding ---------------------------------

def _patch_embed_kernel(p_ref, w_ref, b_ref, o_ref):
    # p: (TM, K) bf16, w: (K, D) bf16 (pre-transposed), b: (1, D) f32
    acc = jnp.dot(p_ref[...], w_ref[...], preferred_element_type=jnp.float32)
    o_ref[...] = (acc + b_ref[...]).astype(o_ref.dtype)


def patch_embed(patches_bf16, w_t_bf16, bias_f32, *, tm, buffered_weights):
    M, K = patches_bf16.shape
    D = w_t_bf16.shape[1]
    blocks = [((tm, K), jnp.bfloat16), ((K, D), jnp.bfloat16),
              ((1, D), jnp.float32), ((tm, D), jnp.float32)]
    return pl.pallas_call(
        _patch_embed_kernel,
        out_shape=jax.ShapeDtypeStruct((M, D), jnp.float32),
        grid=(M // tm,),
        in_specs=[
            pl.BlockSpec((tm, K), lambda i: (i, 0)),
            _const_spec((K, D), buffered_weights),
            _const_spec((1, D), buffered_weights),
        ],
        out_specs=pl.BlockSpec((tm, D), lambda i: (i, 0)),
        compiler_params=pltpu.CompilerParams(
            dimension_semantics=("parallel",),
            vmem_limit_bytes=_vmem_limit(blocks)),
    )(patches_bf16, w_t_bf16, bias_f32)


# ---------------------- fused transformer encoder block ----------------------
# One pallas_call processes `num_layers` encoder layers for one batch element
# per grid step.  Per-layer operands (7): wqkv, wo, w1, w2, bqkv, b1, pack.
# pack rows: [bo, b2, ln1_g, ln1_b, ln2_g, ln2_b, final_g, final_b].

def _encoder_block_kernel(x_ref, *rest, num_layers, num_heads, seq_len,
                          apply_final_ln, head_split):
    o_ref = rest[-1]
    wrefs = rest[:-1]
    x = x_ref[0].astype(jnp.float32)                       # (S, D) f32
    S, D = x.shape
    H = num_heads
    dh = D // H

    for li in range(num_layers):
        wqkv, wo, w1, w2, bqkv, b1, pk = wrefs[7 * li:7 * li + 7]
        pkv = pk[...]                                      # (8, D) f32
        bo, b2 = pkv[0:1], pkv[1:2]
        ln1g, ln1b = pkv[2:3], pkv[3:4]
        ln2g, ln2b = pkv[4:5], pkv[5:6]

        # --- fused QKV projection (1/sqrt(dh) folded into the Q weights) ---
        qkv = jnp.dot(x.astype(jnp.bfloat16), wqkv[...],
                      preferred_element_type=jnp.float32) + bqkv[...]
        qkv_bf = qkv.astype(jnp.bfloat16)                  # bf16 before split

        if head_split == "transpose":
            # (S, 3D) -> (3H, S, dh): one reshape + one major-dim transpose.
            heads = jnp.transpose(qkv_bf.reshape(S, 3 * H, dh), (1, 0, 2))
            q, k, v = heads[:H], heads[H:2 * H], heads[2 * H:]
        else:
            # Fallback path (validated previously): lane slices + stack.
            def _split(y):
                return jnp.stack(
                    [y[:, h * dh:(h + 1) * dh] for h in range(H)], axis=0)
            q = _split(qkv_bf[:, 0 * D:1 * D])
            k = _split(qkv_bf[:, 1 * D:2 * D])
            v = _split(qkv_bf[:, 2 * D:3 * D])

        # --- batched-head attention ---
        s = jnp.einsum("hqd,hkd->hqk", q, k,
                       preferred_element_type=jnp.float32)  # (H, S, S) f32
        if seq_len < S:  # mask padded key positions
            kidx = jax.lax.broadcasted_iota(jnp.int32, (1, 1, S), 2)
            s = jnp.where(kidx < seq_len, s, -1e30)
        s = s - jnp.max(s, axis=-1, keepdims=True)
        p = jnp.exp(s)
        p = p * pl.reciprocal(jnp.sum(p, axis=-1, keepdims=True), approx=True)
        ctx = jnp.einsum("hqk,hkd->hqd", p.astype(jnp.bfloat16), v,
                         preferred_element_type=jnp.float32)  # (H, S, dh)

        if head_split == "transpose":
            attn = jnp.transpose(ctx, (1, 0, 2)).reshape(S, D)
        else:
            attn = jnp.concatenate([ctx[h] for h in range(H)], axis=-1)
        attn = jnp.dot(attn.astype(jnp.bfloat16), wo[...],
                       preferred_element_type=jnp.float32) + bo

        # --- post-norm residual 1 (nn.TransformerEncoderLayer default) ---
        x1 = _layernorm(x + attn, ln1g, ln1b)

        # --- feed-forward (exact GELU, matching activation='gelu') ---
        h1 = jnp.dot(x1.astype(jnp.bfloat16), w1[...],
                     preferred_element_type=jnp.float32) + b1[...]
        h1 = jax.nn.gelu(h1, approximate=False)
        h2 = jnp.dot(h1.astype(jnp.bfloat16), w2[...],
                     preferred_element_type=jnp.float32) + b2

        x = _layernorm(x1 + h2, ln2g, ln2b)

    if apply_final_ln:  # trailing self.norm, fused into the last group
        pk_last = wrefs[7 * (num_layers - 1) + 6][...]
        x = _layernorm(x, pk_last[6:7], pk_last[7:8])
    o_ref[0] = x.astype(o_ref.dtype)


def encoder_block(x, layer_params, *, num_heads, seq_len, apply_final_ln,
                  out_dtype, buffered_weights, head_split):
    B, S, D = x.shape
    operands = [x]
    for lp in layer_params:
        operands += [lp["wqkv"], lp["wo"], lp["w1"], lp["w2"],
                     lp["bqkv"], lp["b1"], lp["pack"]]

    in_specs = [pl.BlockSpec((1, S, D), lambda b: (b, 0, 0))]
    in_specs += [_const_spec(tuple(op.shape), buffered_weights)
                 for op in operands[1:]]

    blocks = [((1, S, D), x.dtype)]
    blocks += [(tuple(op.shape), op.dtype) for op in operands[1:]]
    blocks += [((1, S, D), out_dtype)]

    kernel = functools.partial(
        _encoder_block_kernel, num_layers=len(layer_params),
        num_heads=num_heads, seq_len=seq_len,
        apply_final_ln=apply_final_ln, head_split=head_split)

    # TODO(synk): when B == 1 on v7x (2 TensorCores) add a second "parallel"
    # grid axis (query-token tiles / FF chunks) so both cores stay busy.
    return pl.pallas_call(
        kernel,
        out_shape=jax.ShapeDtypeStruct((B, S, D), out_dtype),
        grid=(B,),
        in_specs=in_specs,
        out_specs=pl.BlockSpec((1, S, D), lambda b: (b, 0, 0)),
        compiler_params=pltpu.CompilerParams(
            dimension_semantics=("parallel",),
            vmem_limit_bytes=_vmem_limit(blocks)),
    )(*operands)


def _layers_per_call(depth, D, FF, buffered_weights):
    """How many encoder layers to fuse per pallas_call: fit the fused weights
    (single- or double-buffered) in ~40% of VMEM, leaving room for activation
    blocks and compiler temporaries."""
    per_layer = (3 * D * D + D * D + 2 * D * FF) * 2 + (3 * D + FF + 8 * D) * 4
    mult = 1 if buffered_weights else 2
    budget = int(0.4 * _vmem_capacity_bytes())
    return max(1, min(depth, budget // max(1, per_layer * mult)))


# ------------------------------ parameters ------------------------------------

def init_params(key, *, img_size, patch_size, in_channels, embed_dim,
                depth, num_heads, mlp_ratio):
    num_patches = (img_size // patch_size) ** 2
    ff = int(embed_dim * mlp_ratio)
    keys = jax.random.split(key, 6 + depth)

    def randn(k, shape, scale=0.02):
        return (scale * jax.random.normal(k, shape)).astype(jnp.float32)

    params = {
        # Conv2d(in_channels, embed_dim, k=P, stride=P) weight (D, C, P, P)
        "patch_w": randn(keys[0], (embed_dim, in_channels, patch_size, patch_size)),
        "patch_b": randn(keys[1], (1, embed_dim)),
        "cls_token": randn(keys[2], (1, 1, embed_dim)),
        "pos_embed": randn(keys[3], (1, num_patches + 1, embed_dim)),
        "norm_g": jnp.ones((1, embed_dim), jnp.float32),
        "norm_b": jnp.zeros((1, embed_dim), jnp.float32),
        "layers": [],
    }
    for li in range(depth):
        lk = jax.random.split(keys[6 + li], 8)
        params["layers"].append({
            "wq": randn(lk[0], (embed_dim, embed_dim)),
            "wk": randn(lk[1], (embed_dim, embed_dim)),
            "wv": randn(lk[2], (embed_dim, embed_dim)),
            "bq": jnp.zeros((1, embed_dim), jnp.float32),
            "bk": jnp.zeros((1, embed_dim), jnp.float32),
            "bv": jnp.zeros((1, embed_dim), jnp.float32),
            "wo": randn(lk[3], (embed_dim, embed_dim)),
            "bo": jnp.zeros((1, embed_dim), jnp.float32),
            "ln1_g": jnp.ones((1, embed_dim), jnp.float32),
            "ln1_b": jnp.zeros((1, embed_dim), jnp.float32),
            "w1": randn(lk[4], (ff, embed_dim)),
            "b1": jnp.zeros((1, ff), jnp.float32),
            "w2": randn(lk[5], (embed_dim, ff)),
            "b2": jnp.zeros((1, embed_dim), jnp.float32),
            "ln2_g": jnp.ones((1, embed_dim), jnp.float32),
            "ln2_b": jnp.zeros((1, embed_dim), jnp.float32),
        })
    return params


def prepare_params(params, *, num_heads):
    """One-time weight preparation: fuse QKV, transpose all weights to
    (D_in, D_out), fold 1/sqrt(head_dim) into Q, cast matmul weights to bf16,
    and pack the small per-layer bias/LN vectors into one (8, D) array."""
    D, C, P, _ = params["patch_w"].shape
    K = C * P * P
    assert D % num_heads == 0
    dh = D // num_heads
    scale = 1.0 / float(dh) ** 0.5
    depth = len(params["layers"])

    layers = []
    for li, lp in enumerate(params["layers"]):
        wqkv = jnp.concatenate([lp["wq"] * scale, lp["wk"], lp["wv"]],
                               axis=0).T.astype(jnp.bfloat16)       # (D, 3D)
        bqkv = jnp.concatenate([lp["bq"] * scale, lp["bk"], lp["bv"]], axis=1)
        if li == depth - 1:  # the trailing self.norm rides in the last pack
            fin_g, fin_b = params["norm_g"], params["norm_b"]
        else:
            fin_g = jnp.ones((1, D), jnp.float32)
            fin_b = jnp.zeros((1, D), jnp.float32)
        pack = jnp.concatenate(
            [lp["bo"], lp["b2"], lp["ln1_g"], lp["ln1_b"],
             lp["ln2_g"], lp["ln2_b"], fin_g, fin_b], axis=0)       # (8, D)
        layers.append({
            "wqkv": wqkv,
            "bqkv": bqkv,
            "wo": lp["wo"].T.astype(jnp.bfloat16),                  # (D, D)
            "w1": lp["w1"].T.astype(jnp.bfloat16),                  # (D, FF)
            "b1": lp["b1"],
            "w2": lp["w2"].T.astype(jnp.bfloat16),                  # (FF, D)
            "pack": pack,
        })

    prepared = {
        "patch_w_t": params["patch_w"].reshape(D, K).T.astype(jnp.bfloat16),
        "patch_b": params["patch_b"],
        "cls_token": params["cls_token"],
        "pos_embed": params["pos_embed"],
        "layers": layers,
    }
    return jax.block_until_ready(prepared)


# ------------------------------ full forward ----------------------------------

def vit_encoder_forward(x_nchw, prepared, *, patch_size, num_heads,
                        buffered_weights=True, head_split="transpose"):
    B, C, H, W = x_nchw.shape
    P = patch_size
    nH, nW = H // P, W // P
    N = nH * nW
    K, D = prepared["patch_w_t"].shape
    assert K == C * P * P

    # ---- patch extraction (Conv2d(k=P, stride=P) im2col, (c, ph, pw) order) --
    # TODO(synk): for large images fold this strided gather into the embed
    # kernel's index_map (grid over (b, nH, nW)) instead of a 6-D XLA transpose.
    xp = x_nchw.reshape(B, C, nH, P, nW, P).transpose(0, 2, 4, 1, 3, 5)
    patches = xp.reshape(B * N, K).astype(jnp.float32)

    # ---- row-tiled patch embedding ----
    M = B * N
    tm = min(512, _round_up(M, 8))
    Mp = _round_up(M, tm)
    if Mp != M:
        patches = jnp.pad(patches, ((0, Mp - M), (0, 0)))
    emb = patch_embed(patches.astype(jnp.bfloat16), prepared["patch_w_t"],
                      prepared["patch_b"], tm=tm,
                      buffered_weights=buffered_weights)
    emb = emb[:M].reshape(B, N, D)

    # ---- cls token + positional embedding (XLA glue) ----
    cls = jnp.broadcast_to(prepared["cls_token"], (B, 1, D)).astype(jnp.float32)
    x = jnp.concatenate([cls, emb], axis=1) + prepared["pos_embed"]
    # pos_drop / layer dropouts: identity in eval mode.

    # ---- pad sequence once to a multiple of 16 (bf16: 2 rows / sublane);
    #      padded key positions are masked inside the softmax ----
    S = N + 1
    Sp = _round_up(S, 16)
    if Sp != S:
        x = jnp.pad(x, ((0, 0), (0, Sp - S), (0, 0)))

    # ---- transformer layers: fused groups, bf16 residual stream between
    #      groups, final LayerNorm fused into the last group ----
    # TODO(synk): if embed_dim is not a multiple of 128 (toy D=32) the output
    # stores are lane-masked; real ViT dims (768/1024) are already lane-dense.
    x = x.astype(jnp.bfloat16)
    depth = len(prepared["layers"])
    FF = prepared["layers"][0]["w1"].shape[1]
    n_fuse = _layers_per_call(depth, D, FF, buffered_weights)
    li = 0
    while li < depth:
        n = min(n_fuse, depth - li)
        last = (li + n == depth)
        x = encoder_block(x, prepared["layers"][li:li + n],
                          num_heads=num_heads, seq_len=S,
                          apply_final_ln=last,
                          out_dtype=jnp.float32 if last else jnp.bfloat16,
                          buffered_weights=buffered_weights,
                          head_split=head_split)
        li += n
    return x[:, :S, :]


# --------------------------------- main ---------------------------------------

if __name__ == "__main__":
    # Small configuration consistent with the module's forward pass.
    img_size = 32
    patch_size = 8
    in_channels = 1
    embed_dim = 32
    depth = 2
    num_heads = 4
    mlp_ratio = 4.0
    batch = 2

    key = jax.random.PRNGKey(0)
    k_img, k_par = jax.random.split(key)

    x = jax.random.normal(k_img, (batch, in_channels, img_size, img_size),
                          dtype=jnp.float32)
    params = init_params(k_par, img_size=img_size, patch_size=patch_size,
                         in_channels=in_channels, embed_dim=embed_dim,
                         depth=depth, num_heads=num_heads, mlp_ratio=mlp_ratio)
    prepared = prepare_params(params, num_heads=num_heads)

    def run(buffered, head_split):
        out = vit_encoder_forward(x, prepared, patch_size=patch_size,
                                  num_heads=num_heads,
                                  buffered_weights=buffered,
                                  head_split=head_split)
        return jax.block_until_ready(out)

    # Capability fallback chain: single-buffered weights + reshape/transpose
    # head split first; the final attempt matches the previously validated
    # configuration (double-buffered specs, slice-based head split).
    out, last_err = None, None
    for buffered, head_split in ((True, "transpose"),
                                 (False, "transpose"),
                                 (False, "slice")):
        try:
            out = run(buffered, head_split)
            break
        except Exception as e:  # noqa: BLE001 - deliberate capability probe
            last_err = e
    if out is None:
        raise last_err

    num_patches = (img_size // patch_size) ** 2
    assert out.shape == (batch, num_patches + 1, embed_dim), out.shape
    assert bool(jnp.all(jnp.isfinite(out)))
    print("KERNEL_OK")
</pallas_src>

<mosaic_0001>
module attributes {stable_mosaic.version = 11 : i64} {
  func.func @_patch_embed_kernel(%arg0: i32, %arg1: memref<32x64xbf16, #tpu.memory_space<vmem>>, %arg2: memref<64x32xbf16, #tpu.memory_space<vmem>>, %arg3: memref<1x32xf32, #tpu.memory_space<vmem>>, %arg4: memref<32x32xf32, #tpu.memory_space<vmem>>) attributes {dimension_semantics = [#tpu.dimension_semantics<parallel>], iteration_bounds = array<i64: 1>, scalar_prefetch = 0 : i64, scratch_operands = 0 : i64, tpu.core_type = #tpu.core_type<tc>, window_params = [{transform_indices = @transform_0, window_bounds = array<i64: 32, 64>}, {pipeline_mode = #tpu.pipeline_mode<synchronous>, transform_indices = @transform_1, window_bounds = array<i64: 64, 32>}, {pipeline_mode = #tpu.pipeline_mode<synchronous>, transform_indices = @transform_2, window_bounds = array<i64: 1, 32>}, {transform_indices = @transform_3, window_bounds = array<i64: 32, 32>}]} {
    %c0 = arith.constant 0 : index
    %c0_0 = arith.constant 0 : index
    %0 = vector.load %arg1[%c0, %c0_0] : memref<32x64xbf16, #tpu.memory_space<vmem>>, vector<32x64xbf16>
    %c0_1 = arith.constant 0 : index
    %c0_2 = arith.constant 0 : index
    %1 = vector.load %arg2[%c0_1, %c0_2] : memref<64x32xbf16, #tpu.memory_space<vmem>>, vector<64x32xbf16>
    %cst = arith.constant dense<0.000000e+00> : vector<32x32xf32>
    %2 = tpu.matmul %0, %1, %cst {dimension_numbers = #tpu.dot_dimension_numbers<[1], [0], [0], [1], [0, 0, 1, 1], [], []>} : vector<32x64xbf16>, vector<64x32xbf16>, vector<32x32xf32> -> vector<32x32xf32>
    %c0_3 = arith.constant 0 : index
    %c0_4 = arith.constant 0 : index
    %3 = vector.load %arg3[%c0_3, %c0_4] : memref<1x32xf32, #tpu.memory_space<vmem>>, vector<1x32xf32>
    %4 = vector.broadcast %3 : vector<1x32xf32> to vector<32x32xf32>
    %5 = arith.addf %2, %4 : vector<32x32xf32>
    %c0_5 = arith.constant 0 : index
    %c0_6 = arith.constant 0 : index
    %6 = vector.load %arg4[%c0_5, %c0_6] : memref<32x32xf32, #tpu.memory_space<vmem>>, vector<32x32xf32>
    tpu.vector_store %arg4[%c0_5, %c0_6], %5 {strides = array<i32>} : memref<32x32xf32, #tpu.memory_space<vmem>>, vector<32x32xf32>,
    return
  }
  func.func @transform_0(%arg0: i32) -> (i32, i32) {
    %c0_i32 = arith.constant 0 : i32
    %c0_i32_0 = arith.constant 0 : i32
    return %arg0, %c0_i32 : i32, i32
  }
  func.func @transform_1(%arg0: i32) -> (i32, i32) {
    %c0_i32 = arith.constant 0 : i32
    %c0_i32_0 = arith.constant 0 : i32
    %c0_i32_1 = arith.constant 0 : i32
    return %c0_i32, %c0_i32_0 : i32, i32
  }
  func.func @transform_2(%arg0: i32) -> (i32, i32) {
    %c0_i32 = arith.constant 0 : i32
    %c0_i32_0 = arith.constant 0 : i32
    %c0_i32_1 = arith.constant 0 : i32
    return %c0_i32, %c0_i32_0 : i32, i32
  }
  func.func @transform_3(%arg0: i32) -> (i32, i32) {
    %c0_i32 = arith.constant 0 : i32
    %c0_i32_0 = arith.constant 0 : i32
    return %arg0, %c0_i32 : i32, i32
  }
}

module attributes {stable_mosaic.version = 11 : i64} {
  func.func @_patch_embed_kernel(%arg0: i32, %arg1: memref<32x64xbf16, #tpu.memory_space<vmem>>, %arg2: memref<64x32xbf16, #tpu.memory_space<vmem>>, %arg3: memref<1x32xf32, #tpu.memory_space<vmem>>, %arg4: memref<32x32xf32, #tpu.memory_space<vmem>>) attributes {dimension_semantics = [#tpu.dimension_semantics<parallel>], iteration_bounds = array<i64: 1>, scalar_prefetch = 0 : i64, scratch_operands = 0 : i64, tpu.core_type = #tpu.core_type<tc>, window_params = [{transform_indices = @transform_0, window_bounds = array<i64: 32, 64>}, {pipeline_mode = #tpu.pipeline_mode<synchronous>, transform_indices = @transform_1, window_bounds = array<i64: 64, 32>}, {pipeline_mode = #tpu.pipeline_mode<synchronous>, transform_indices = @transform_2, window_bounds = array<i64: 1, 32>}, {transform_indices = @transform_3, window_bounds = array<i64: 32, 32>}]} {
    %c0 = arith.constant 0 : index
    %c0_0 = arith.constant 0 : index
    %0 = vector.load %arg1[%c0, %c0_0] : memref<32x64xbf16, #tpu.memory_space<vmem>>, vector<32x64xbf16>
    %c0_1 = arith.constant 0 : index
    %c0_2 = arith.constant 0 : index
    %1 = vector.load %arg2[%c0_1, %c0_2] : memref<64x32xbf16, #tpu.memory_space<vmem>>, vector<64x32xbf16>
    %cst = arith.constant dense<0.000000e+00> : vector<32x32xf32>
    %2 = tpu.matmul %0, %1, %cst {dimension_numbers = #tpu.dot_dimension_numbers<[1], [0], [0], [1], [0, 0, 1, 1], [], []>} : vector<32x64xbf16>, vector<64x32xbf16>, vector<32x32xf32> -> vector<32x32xf32>
    %c0_3 = arith.constant 0 : index
    %c0_4 = arith.constant 0 : index
    %3 = vector.load %arg3[%c0_3, %c0_4] : memref<1x32xf32, #tpu.memory_space<vmem>>, vector<1x32xf32>
    %4 = vector.broadcast %3 : vector<1x32xf32> to vector<32x32xf32>
    %5 = arith.addf %2, %4 : vector<32x32xf32>
    %c0_5 = arith.constant 0 : index
    %c0_6 = arith.constant 0 : index
    %6 = vector.load %arg4[%c0_5, %c0_6] : memref<32x32xf32, #tpu.memory_space<vmem>>, vector<32x32xf32>
    tpu.vector_store %arg4[%c0_5, %c0_6], %5 {strides = array<i32>} : memref<32x32xf32, #tpu.memory_space<vmem>>, vector<32x32xf32>,
    return
  }
  func.func @transform_0(%arg0: i32) -> (i32, i32) {
    %c0_i32 = arith.constant 0 : i32
    %c0_i32_0 = arith.constant 0 : i32
    return %arg0, %c0_i32 : i32, i32
  }
  func.func @transform_1(%arg0: i32) -> (i32, i32) {
    %c0_i32 = arith.constant 0 : i32
    %c0_i32_0 = arith.constant 0 : i32
    %c0_i32_1 = arith.constant 0 : i32
    return %c0_i32, %c0_i32_0 : i32, i32
  }
  func.func @transform_2(%arg0: i32) -> (i32, i32) {
    %c0_i32 = arith.constant 0 : i32
    %c0_i32_0 = arith.constant 0 : i32
    %c0_i32_1 = arith.constant 0 : i32
    return %c0_i32, %c0_i32_0 : i32, i32
  }
  func.func @transform_3(%arg0: i32) -> (i32, i32) {
    %c0_i32 = arith.constant 0 : i32
    %c0_i32_0 = arith.constant 0 : i32
    return %arg0, %c0_i32 : i32, i32
  }
}

module attributes {stable_mosaic.version = 11 : i64} {
  func.func @_patch_embed_kernel(%arg0: i32, %arg1: memref<32x64xbf16, #tpu.memory_space<vmem>>, %arg2: memref<64x32xbf16, #tpu.memory_space<vmem>>, %arg3: memref<1x32xf32, #tpu.memory_space<vmem>>, %arg4: memref<32x32xf32, #tpu.memory_space<vmem>>) attributes {dimension_semantics = [#tpu.dimension_semantics<parallel>], iteration_bounds = array<i64: 1>, scalar_prefetch = 0 : i64, scratch_operands = 0 : i64, tpu.core_type = #tpu.core_type<tc>, window_params = [{transform_indices = @transform_0, window_bounds = array<i64: 32, 64>}, {pipeline_mode = #tpu.pipeline_mode<synchronous>, transform_indices = @transform_1, window_bounds = array<i64: 64, 32>}, {pipeline_mode = #tpu.pipeline_mode<synchronous>, transform_indices = @transform_2, window_bounds = array<i64: 1, 32>}, {transform_indices = @transform_3, window_bounds = array<i64: 32, 32>}]} {
    %c0 = arith.constant 0 : index
    %c0_0 = arith.constant 0 : index
    %0 = vector.load %arg1[%c0, %c0_0] : memref<32x64xbf16, #tpu.memory_space<vmem>>, vector<32x64xbf16>
    %c0_1 = arith.constant 0 : index
    %c0_2 = arith.constant 0 : index
    %1 = vector.load %arg2[%c0_1, %c0_2] : memref<64x32xbf16, #tpu.memory_space<vmem>>, vector<64x32xbf16>
    %cst = arith.constant dense<0.000000e+00> : vector<32x32xf32>
    %2 = tpu.matmul %0, %1, %cst {dimension_numbers = #tpu.dot_dimension_numbers<[1], [0], [0], [1], [0, 0, 1, 1], [], []>} : vector<32x64xbf16>, vector<64x32xbf16>, vector<32x32xf32> -> vector<32x32xf32>
    %c0_3 = arith.constant 0 : index
    %c0_4 = arith.constant 0 : index
    %3 = vector.load %arg3[%c0_3, %c0_4] : memref<1x32xf32, #tpu.memory_space<vmem>>, vector<1x32xf32>
    %4 = vector.broadcast %3 : vector<1x32xf32> to vector<32x32xf32>
    %5 = arith.addf %2, %4 : vector<32x32xf32>
    %c0_5 = arith.constant 0 : index
    %c0_6 = arith.constant 0 : index
    %6 = vector.load %arg4[%c0_5, %c0_6] : memref<32x32xf32, #tpu.memory_space<vmem>>, vector<32x32xf32>
    tpu.vector_store %arg4[%c0_5, %c0_6], %5 {strides = array<i32>} : memref<32x32xf32, #tpu.memory_space<vmem>>, vector<32x32xf32>,
    return
  }
  func.func @transform_0(%arg0: i32) -> (i32, i32) {
    %c0_i32 = arith.constant 0 : i32
    %c0_i32_0 = arith.constant 0 : i32
    return %arg0, %c0_i32 : i32, i32
  }
  func.func @transform_1(%arg0: i32) -> (i32, i32) {
    %c0_i32 = arith.constant 0 : i32
    %c0_i32_0 = arith.constant 0 : i32
    %c0_i32_1 = arith.constant 0 : i32
    return %c0_i32, %c0_i32_0 : i32, i32
  }
  func.func @transform_2(%arg0: i32) -> (i32, i32) {
    %c0_i32 = arith.constant 0 : i32
    %c0_i32_0 = arith.constant 0 : i32
    %c0_i32_1 = arith.constant 0 : i32
    return %c0_i32, %c0_i32_0 : i32, i32
  }
  func.func @transform_3(%arg0: i32) -> (i32, i32) {
    %c0_i32 = arith.constant 0 : i32
    %c0_i32_0 = arith.constant 0 : i32
    return %arg0, %c0_i32 : i32, i32
  }
}

</mosaic_0001>

<llo_original>
// kernel: tpu_custom_call.1
$region0: #{tpu_custom_call.1}
  #allocation0 [shape = 'u32[]', space=smem, size = 0x4, offset = 0x4, fixed_abs, tag = 'smem constant byte address 0x4 - core index']
  #allocation1 [shape = 'u32[144,128]{1,0:T(1,128)}', space=vmem, size = 0x12000, scoped, tag = 'internal scratch']
  %s0 = inlined_call_operand.vmem [shape: bf16[32,64], index: 0, kind: input, shape index: {}]
  %s1 = inlined_call_operand.vmem [shape: bf16[64,32], index: 1, kind: input, shape index: {}]
  %s2 = inlined_call_operand.vmem [shape: f32[1,32], index: 2, kind: input, shape index: {}]
  %s3 = inlined_call_operand.hbm [shape: f32[32,32], index: 3, kind: output, shape index: {}]
  %s4 = sld [smem:[#allocation0]]
  $region22: #{tpu_custom_call.1} parent=0
    _
  %s6 = ssub.s32 1, %s4
  %s7 = scalar_select 0, %s6, %s4
  $region1: #{tpu_custom_call.1} parent=0
    #allocation2 [shape = 'u8[16384]{0}', space=vmem, size = 0x4000, scoped, tag = 'output window, operand 0, single buffered']
    #allocation3 [shape = 's32[1]{0}', space=sflag, size = 0x4, scoped, tag = 'scoped memory for tpu_custom_call.1']
    %8 = vsyncpa [#allocation3], 0
    // Predicated region
    $region2: #{tpu_custom_call.1} parent=1 // pred_check
      _
    $region3: #{tpu_custom_call.1} parent=1 // pred_check_branch
      %10 = sbr.rel (0) target = $region5
    $region4: #{tpu_custom_call.1} parent=1 // pred_region
      _
    $region5: #{tpu_custom_call.1} parent=1 // pred_fallthru
      _
    // Predicated region
    $region6: #{tpu_custom_call.1} parent=1 // pred_check
      _
    $region7: #{tpu_custom_call.1} parent=1 // pred_check_branch
      %12 = sbr.rel (0) target = $region9
    $region8: #{tpu_custom_call.1} parent=1 // pred_region
      _
    $region9: #{tpu_custom_call.1} parent=1 // pred_fallthru
      _
    // Predicated region
    $region10: #{tpu_custom_call.1} parent=1 // pred_check
      _
    $region11: #{tpu_custom_call.1} parent=1 // pred_check_branch
      %14 = sbr.rel (0) target = $region13
    $region12: #{tpu_custom_call.1} parent=1 // pred_region
      _
    $region13: #{tpu_custom_call.1} parent=1 // pred_fallthru
      _
    %v16 = vld [vmem:[%s0] sm:$0xf]
    %v17 = vld [vmem:[%s0 + $0x4] sm:$0xf]
    %v18 = vld [vmem:[%s0 + $0x8] sm:$0xf]
    %v19 = vld [vmem:[%s0 + $0xc] sm:$0xf]
    %v20 = vld [vmem:[%s1] sm:$0xf]
    %v21 = vld [vmem:[%s1 + $0x4] sm:$0xf]
    %v22 = vld [vmem:[%s1 + $0x8] sm:$0xf]
    %v23 = vld [vmem:[%s1 + $0xc] sm:$0xf]
    %v24 = vld [vmem:[%s1 + $0x10] sm:$0xf]
    %v25 = vld [vmem:[%s1 + $0x14] sm:$0xf]
    %v26 = vld [vmem:[%s1 + $0x18] sm:$0xf]
    %v27 = vld [vmem:[%s1 + $0x1c] sm:$0xf]
    %v28 = vld [vmem:[%s2] sm:$0x1]
    %v30 = vlaneseq
    %v31 = vshrl.u32 %v30, 7
    %v32 = vsub.s32 0, %v31
    %v33 = vrot.slane %v28, %v32
    %v39 = vunpack.c.l.b16 %v16
    %v40 = vunpack.c.l.b16 %v17
    %v41 = vunpack.c.l.b16 %v18
    %v42 = vunpack.c.l.b16 %v19
    %v43 = vpack.c.b16 %v40, %v39
    %v44 = vpack.c.b16 %v42, %v41
    %v53 = vunpack.c.l.b16 %v20
    %v54 = vunpack.c.l.b16 %v21
    %v55 = vunpack.c.l.b16 %v22
    %v56 = vunpack.c.l.b16 %v23
    %v57 = vunpack.c.l.b16 %v24
    %v58 = vunpack.c.l.b16 %v25
    %v59 = vunpack.c.l.b16 %v26
    %v60 = vunpack.c.l.b16 %v27
    %v61 = vpack.c.b16 %v54, %v53
    %v62 = vpack.c.b16 %v56, %v55
    %v63 = vpack.c.b16 %v58, %v57
    %v64 = vpack.c.b16 %v60, %v59
    %vm69 = vcmask 523264
    %v71 = vsel %vm69, %v43, 0
    %v74 = vsel %vm69, %v44, 0
    %76 = vmatprep.subr.bf16.mxu0 0
    %77 = vmatpush1.bf16.msra.mxu0 %v61
    %78 = vmatprep.subr.bf16.mxu0 0
    %79 = vmatpush1.bf16.msra.mxu0 %v62
    %80 = vmatprep.subr.bf16.mxu0 0
    %81 = vmatpush1.bf16.msra.mxu0 %v63
    %82 = vmatprep.subr.bf16.mxu0 0
    %83 = vmatpush1.bf16.msra.mxu0 %v64
    %84 = vmatprep.subr.bf16.mxu0 0
    %85 = vmatpush1.bf16.msra.mxu0 0
    %86 = vmatprep.subr.bf16.mxu0 0
    %87 = vmatpush1.bf16.msra.mxu0 0
    %88 = vmatprep.subr.bf16.mxu0 0
    %89 = vmatpush1.bf16.msra.mxu0 0
    %90 = vmatprep.subr.bf16.mxu0 0
    %91 = vmatpush1.bf16.msra.mxu0 0
    %92 = vmatprep.subr.bf16.mxu0 0
    %93 = vmatpush1.bf16.msra.mxu0 0
    %94 = vmatprep.subr.bf16.mxu0 0
    %95 = vmatpush1.bf16.msra.mxu0 0
    %96 = vmatprep.subr.bf16.mxu0 0
    %97 = vmatpush1.bf16.msra.mxu0 0
    %98 = vmatprep.subr.bf16.mxu0 0
    %99 = vmatpush1.bf16.msra.mxu0 0
    %100 = vmatprep.subr.bf16.mxu0 0
    %101 = vmatpush1.bf16.msra.mxu0 0
    %102 = vmatprep.subr.bf16.mxu0 0
    %103 = vmatpush1.bf16.msra.mxu0 0
    %104 = vmatprep.subr.bf16.mxu0 0
    %105 = vmatpush1.bf16.msra.mxu0 0
    %106 = vmatprep.subr.bf16.mxu0 0
    %107 = vmatpush1.bf16.msra.mxu0 0
    %108 = vmatprep.mubr.bf16.mxu0 0
    %109 = vmatmul.mubr.bf16.gmra.mrb[0].mxu0 %v71
    %v110 = vpop.f32.mrb[0].mxu0
    %v111 = vadd.f32 %v33, %v110
    %v112 = vpop.f32.mrb[0].mxu0
    %v113 = vpop.f32.mrb[0].mxu0
    %v114 = vadd.f32 %v33, %v113
    %v115 = vpop.f32.mrb[0].mxu0
    %116 = vmatprep.mubr.bf16.mxu0 0
    %117 = vmatmul.mubr.bf16.gmra.mrb[0].mxu0 %v74
    %v118 = vpop.f32.mrb[0].mxu0
    %v119 = vadd.f32 %v33, %v118
    %v120 = vpop.f32.mrb[0].mxu0
    %v121 = vpop.f32.mrb[0].mxu0
    %v122 = vadd.f32 %v33, %v121
    %v123 = vpop.f32.mrb[0].mxu0
    %124 = vdwg.mxu0
    %vm125 = vcmask 261120
    %126 = vst.msk [vmem:[#allocation2] sm:$0xff] %vm125, %v111
    %127 = vst.msk [vmem:[#allocation2 + $0x8] sm:$0xff] %vm125, %v114
    %128 = vst.msk [vmem:[#allocation2 + $0x10] sm:$0xff] %vm125, %v119
    %129 = vst.msk [vmem:[#allocation2 + $0x18] sm:$0xff] %vm125, %v122
    // Predicated region
    $region14: #{tpu_custom_call.1} parent=1 // pred_check
      _
    $region15: #{tpu_custom_call.1} parent=1 // pred_check_branch
      %131 = sbr.rel (0) target = $region17
    $region16: #{tpu_custom_call.1} parent=1 // pred_region
      %s133 = ssub.s32 512, 512
      %134 = vsyncadd [#allocation3], %s133
      %s135 = sshll.u32 [#allocation2], 4
      %s136 = int_to_ptr.vmem [resolvable:$true] %s135
      %141 = dma.vmem_to_hbm [thread:$0]  %s136, 512, %s3, [#allocation3], 128, 128, 8
    $region17: #{tpu_custom_call.1} parent=1 // pred_fallthru
      _
    // Predicated region
    $region18: #{tpu_custom_call.1} parent=1 // pred_check
      _
    $region19: #{tpu_custom_call.1} parent=1 // pred_check_branch
      %143 = sbr.rel (0) target = $region21
    $region20: #{tpu_custom_call.1} parent=1 // pred_region
      %144 = dma.done [#allocation3], 512
    $region21: #{tpu_custom_call.1} parent=1 // pred_fallthru
      _
    %145 = vsyncpa [#allocation3], 1

// kernel: tpu_custom_call.1
$region0: #{tpu_custom_call.1}
  #allocation0 [shape = 'u32[]', space=smem, size = 0x4, offset = 0x4, fixed_abs, tag = 'smem constant byte address 0x4 - core index']
  #allocation1 [shape = 'u32[144,128]{1,0:T(1,128)}', space=vmem, size = 0x12000, scoped, tag = 'internal scratch']
  %s0 = inlined_call_operand.vmem [shape: bf16[32,64], index: 0, kind: input, shape index: {}]
  %s1 = inlined_call_operand.vmem [shape: bf16[64,32], index: 1, kind: input, shape index: {}]
  %s2 = inlined_call_operand.vmem [shape: f32[1,32], index: 2, kind: input, shape index: {}]
  %s3 = inlined_call_operand.hbm [shape: f32[32,32], index: 3, kind: output, shape index: {}]
  %s4 = sld [smem:[#allocation0]]
  $region22: #{tpu_custom_call.1} parent=0
    _
  %s6 = ssub.s32 1, %s4
  %s7 = scalar_select 0, %s6, %s4
  $region1: #{tpu_custom_call.1} parent=0
    #allocation2 [shape = 'u8[16384]{0}', space=vmem, size = 0x4000, scoped, tag = 'output window, operand 0, single buffered']
    #allocation3 [shape = 's32[1]{0}', space=sflag, size = 0x4, scoped, tag = 'scoped memory for tpu_custom_call.1']
    %8 = vsyncpa [#allocation3], 0
    // Predicated region
    $region2: #{tpu_custom_call.1} parent=1 // pred_check
      _
    $region3: #{tpu_custom_call.1} parent=1 // pred_check_branch
      %10 = sbr.rel (0) target = $region5
    $region4: #{tpu_custom_call.1} parent=1 // pred_region
      _
    $region5: #{tpu_custom_call.1} parent=1 // pred_fallthru
      _
    // Predicated region
    $region6: #{tpu_custom_call.1} parent=1 // pred_check
      _
    $region7: #{tpu_custom_call.1} parent=1 // pred_check_branch
      %12 = sbr.rel (0) target = $region9
    $region8: #{tpu_custom_call.1} parent=1 // pred_region
      _
    $region9: #{tpu_custom_call.1} parent=1 // pred_fallthru
      _
    // Predicated region
    $region10: #{tpu_custom_call.1} parent=1 // pred_check
      _
    $region11: #{tpu_custom_call.1} parent=1 // pred_check_branch
      %14 = sbr.rel (0) target = $region13
    $region12: #{tpu_custom_call.1} parent=1 // pred_region
      _
    $region13: #{tpu_custom_call.1} parent=1 // pred_fallthru
      _
    %v16 = vld [vmem:[%s0] sm:$0xf]
    %v17 = vld [vmem:[%s0 + $0x4] sm:$0xf]
    %v18 = vld [vmem:[%s0 + $0x8] sm:$0xf]
    %v19 = vld [vmem:[%s0 + $0xc] sm:$0xf]
    %v20 = vld [vmem:[%s1] sm:$0xf]
    %v21 = vld [vmem:[%s1 + $0x4] sm:$0xf]
    %v22 = vld [vmem:[%s1 + $0x8] sm:$0xf]
    %v23 = vld [vmem:[%s1 + $0xc] sm:$0xf]
    %v24 = vld [vmem:[%s1 + $0x10] sm:$0xf]
    %v25 = vld [vmem:[%s1 + $0x14] sm:$0xf]
    %v26 = vld [vmem:[%s1 + $0x18] sm:$0xf]
    %v27 = vld [vmem:[%s1 + $0x1c] sm:$0xf]
    %v28 = vld [vmem:[%s2] sm:$0x1]
    %v30 = vlaneseq
    %v31 = vshrl.u32 %v30, 7
    %v32 = vsub.s32 0, %v31
    %v33 = vrot.slane %v28, %v32
    %v39 = vunpack.c.l.b16 %v16
    %v40 = vunpack.c.l.b16 %v17
    %v41 = vunpack.c.l.b16 %v18
    %v42 = vunpack.c.l.b16 %v19
    %v43 = vpack.c.b16 %v40, %v39
    %v44 = vpack.c.b16 %v42, %v41
    %v53 = vunpack.c.l.b16 %v20
    %v54 = vunpack.c.l.b16 %v21
    %v55 = vunpack.c.l.b16 %v22
    %v56 = vunpack.c.l.b16 %v23
    %v57 = vunpack.c.l.b16 %v24
    %v58 = vunpack.c.l.b16 %v25
    %v59 = vunpack.c.l.b16 %v26
    %v60 = vunpack.c.l.b16 %v27
    %v61 = vpack.c.b16 %v54, %v53
    %v62 = vpack.c.b16 %v56, %v55
    %v63 = vpack.c.b16 %v58, %v57
    %v64 = vpack.c.b16 %v60, %v59
    %vm69 = vcmask 523264
    %v71 = vsel %vm69, %v43, 0
    %v74 = vsel %vm69, %v44, 0
    %76 = vmatprep.subr.bf16.mxu0 0
    %77 = vmatpush1.bf16.msra.mxu0 %v61
    %78 = vmatprep.subr.bf16.mxu0 0
    %79 = vmatpush1.bf16.msra.mxu0 %v62
    %80 = vmatprep.subr.bf16.mxu0 0
    %81 = vmatpush1.bf16.msra.mxu0 %v63
    %82 = vmatprep.subr.bf16.mxu0 0
    %83 = vmatpush1.bf16.msra.mxu0 %v64
    %84 = vmatprep.subr.bf16.mxu0 0
    %85 = vmatpush1.bf16.msra.mxu0 0
    %86 = vmatprep.subr.bf16.mxu0 0
    %87 = vmatpush1.bf16.msra.mxu0 0
    %88 = vmatprep.subr.bf16.mxu0 0
    %89 = vmatpush1.bf16.msra.mxu0 0
    %90 = vmatprep.subr.bf16.mxu0 0
    %91 = vmatpush1.bf16.msra.mxu0 0
    %92 = vmatprep.subr.bf16.mxu0 0
    %93 = vmatpush1.bf16.msra.mxu0 0
    %94 = vmatprep.subr.bf16.mxu0 0
    %95 = vmatpush1.bf16.msra.mxu0 0
    %96 = vmatprep.subr.bf16.mxu0 0
    %97 = vmatpush1.bf16.msra.mxu0 0
    %98 = vmatprep.subr.bf16.mxu0 0
    %99 = vmatpush1.bf16.msra.mxu0 0
    %100 = vmatprep.subr.bf16.mxu0 0
    %101 = vmatpush1.bf16.msra.mxu0 0
    %102 = vmatprep.subr.bf16.mxu0 0
    %103 = vmatpush1.bf16.msra.mxu0 0
    %104 = vmatprep.subr.bf16.mxu0 0
    %105 = vmatpush1.bf16.msra.mxu0 0
    %106 = vmatprep.subr.bf16.mxu0 0
    %107 = vmatpush1.bf16.msra.mxu0 0
    %108 = vmatprep.mubr.bf16.mxu0 0
    %109 = vmatmul.mubr.bf16.gmra.mrb[0].mxu0 %v71
    %v110 = vpop.f32.mrb[0].mxu0
    %v111 = vadd.f32 %v33, %v110
    %v112 = vpop.f32.mrb[0].mxu0
    %v113 = vpop.f32.mrb[0].mxu0
    %v114 = vadd.f32 %v33, %v113
    %v115 = vpop.f32.mrb[0].mxu0
    %116 = vmatprep.mubr.bf16.mxu0 0
    %117 = vmatmul.mubr.bf16.gmra.mrb[0].mxu0 %v74
    %v118 = vpop.f32.mrb[0].mxu0
    %v119 = vadd.f32 %v33, %v118
    %v120 = vpop.f32.mrb[0].mxu0
    %v121 = vpop.f32.mrb[0].mxu0
    %v122 = vadd.f32 %v33, %v121
    %v123 = vpop.f32.mrb[0].mxu0
    %124 = vdwg.mxu0
    %vm125 = vcmask 261120
    %126 = vst.msk [vmem:[#allocation2] sm:$0xff] %vm125, %v111
    %127 = vst.msk [vmem:[#allocation2 + $0x8] sm:$0xff] %vm125, %v114
    %128 = vst.msk [vmem:[#allocation2 + $0x10] sm:$0xff] %vm125, %v119
    %129 = vst.msk [vmem:[#allocation2 + $0x18] sm:$0xff] %vm125, %v122
    // Predicated region
    $region14: #{tpu_custom_call.1} parent=1 // pred_check
      _
    $region15: #{tpu_custom_call.1} parent=1 // pred_check_branch
      %131 = sbr.rel (0) target = $region17
    $region16: #{tpu_custom_call.1} parent=1 // pred_region
      %s133 = ssub.s32 512, 512
      %134 = vsyncadd [#allocation3], %s133
      %s135 = sshll.u32 [#allocation2], 4
      %s136 = int_to_ptr.vmem [resolvable:$true] %s135
      %141 = dma.vmem_to_hbm [thread:$0]  %s136, 512, %s3, [#allocation3], 128, 128, 8
    $region17: #{tpu_custom_call.1} parent=1 // pred_fallthru
      _
    // Predicated region
    $region18: #{tpu_custom_call.1} parent=1 // pred_check
      _
    $region19: #{tpu_custom_call.1} parent=1 // pred_check_branch
      %143 = sbr.rel (0) target = $region21
    $region20: #{tpu_custom_call.1} parent=1 // pred_region
      %144 = dma.done [#allocation3], 512
    $region21: #{tpu_custom_call.1} parent=1 // pred_fallthru
      _
    %145 = vsyncpa [#allocation3], 1

// kernel: tpu_custom_call.1
$region0: #{tpu_custom_call.1}
  #allocation0 [shape = 'u32[]', space=smem, size = 0x4, offset = 0x4, fixed_abs, tag = 'smem constant byte address 0x4 - core index']
  #allocation1 [shape = 'u32[144,128]{1,0:T(1,128)}', space=vmem, size = 0x12000, scoped, tag = 'internal scratch']
  %s0 = inlined_call_operand.vmem [shape: bf16[32,64], index: 0, kind: input, shape index: {}]
  %s1 = inlined_call_operand.vmem [shape: bf16[64,32], index: 1, kind: input, shape index: {}]
  %s2 = inlined_call_operand.vmem [shape: f32[1,32], index: 2, kind: input, shape index: {}]
  %s3 = inlined_call_operand.hbm [shape: f32[32,32], index: 3, kind: output, shape index: {}]
  %s4 = sld [smem:[#allocation0]]
  $region22: #{tpu_custom_call.1} parent=0
    _
  %s6 = ssub.s32 1, %s4
  %s7 = scalar_select 0, %s6, %s4
  $region1: #{tpu_custom_call.1} parent=0
    #allocation2 [shape = 'u8[16384]{0}', space=vmem, size = 0x4000, scoped, tag = 'output window, operand 0, single buffered']
    #allocation3 [shape = 's32[1]{0}', space=sflag, size = 0x4, scoped, tag = 'scoped memory for tpu_custom_call.1']
    %8 = vsyncpa [#allocation3], 0
    // Predicated region
    $region2: #{tpu_custom_call.1} parent=1 // pred_check
      _
    $region3: #{tpu_custom_call.1} parent=1 // pred_check_branch
      %10 = sbr.rel (0) target = $region5
    $region4: #{tpu_custom_call.1} parent=1 // pred_region
      _
    $region5: #{tpu_custom_call.1} parent=1 // pred_fallthru
      _
    // Predicated region
    $region6: #{tpu_custom_call.1} parent=1 // pred_check
      _
    $region7: #{tpu_custom_call.1} parent=1 // pred_check_branch
      %12 = sbr.rel (0) target = $region9
    $region8: #{tpu_custom_call.1} parent=1 // pred_region
      _
    $region9: #{tpu_custom_call.1} parent=1 // pred_fallthru
      _
    // Predicated region
    $region10: #{tpu_custom_call.1} parent=1 // pred_check
      _
    $region11: #{tpu_custom_call.1} parent=1 // pred_check_branch
      %14 = sbr.rel (0) target = $region13
    $region12: #{tpu_custom_call.1} parent=1 // pred_region
      _
    $region13: #{tpu_custom_call.1} parent=1 // pred_fallthru
      _
    %v16 = vld [vmem:[%s0] sm:$0xf]
    %v17 = vld [vmem:[%s0 + $0x4] sm:$0xf]
    %v18 = vld [vmem:[%s0 + $0x8] sm:$0xf]
    %v19 = vld [vmem:[%s0 + $0xc] sm:$0xf]
    %v20 = vld [vmem:[%s1] sm:$0xf]
    %v21 = vld [vmem:[%s1 + $0x4] sm:$0xf]
    %v22 = vld [vmem:[%s1 + $0x8] sm:$0xf]
    %v23 = vld [vmem:[%s1 + $0xc] sm:$0xf]
    %v24 = vld [vmem:[%s1 + $0x10] sm:$0xf]
    %v25 = vld [vmem:[%s1 + $0x14] sm:$0xf]
    %v26 = vld [vmem:[%s1 + $0x18] sm:$0xf]
    %v27 = vld [vmem:[%s1 + $0x1c] sm:$0xf]
    %v28 = vld [vmem:[%s2] sm:$0x1]
    %v30 = vlaneseq
    %v31 = vshrl.u32 %v30, 7
    %v32 = vsub.s32 0, %v31
    %v33 = vrot.slane %v28, %v32
    %v39 = vunpack.c.l.b16 %v16
    %v40 = vunpack.c.l.b16 %v17
    %v41 = vunpack.c.l.b16 %v18
    %v42 = vunpack.c.l.b16 %v19
    %v43 = vpack.c.b16 %v40, %v39
    %v44 = vpack.c.b16 %v42, %v41
    %v53 = vunpack.c.l.b16 %v20
    %v54 = vunpack.c.l.b16 %v21
    %v55 = vunpack.c.l.b16 %v22
    %v56 = vunpack.c.l.b16 %v23
    %v57 = vunpack.c.l.b16 %v24
    %v58 = vunpack.c.l.b16 %v25
    %v59 = vunpack.c.l.b16 %v26
    %v60 = vunpack.c.l.b16 %v27
    %v61 = vpack.c.b16 %v54, %v53
    %v62 = vpack.c.b16 %v56, %v55
    %v63 = vpack.c.b16 %v58, %v57
    %v64 = vpack.c.b16 %v60, %v59
    %vm69 = vcmask 523264
    %v71 = vsel %vm69, %v43, 0
    %v74 = vsel %vm69, %v44, 0
    %76 = vmatprep.subr.bf16.mxu0 0
    %77 = vmatpush1.bf16.msra.mxu0 %v61
    %78 = vmatprep.subr.bf16.mxu0 0
    %79 = vmatpush1.bf16.msra.mxu0 %v62
    %80 = vmatprep.subr.bf16.mxu0 0
    %81 = vmatpush1.bf16.msra.mxu0 %v63
    %82 = vmatprep.subr.bf16.mxu0 0
    %83 = vmatpush1.bf16.msra.mxu0 %v64
    %84 = vmatprep.subr.bf16.mxu0 0
    %85 = vmatpush1.bf16.msra.mxu0 0
    %86 = vmatprep.subr.bf16.mxu0 0
    %87 = vmatpush1.bf16.msra.mxu0 0
    %88 = vmatprep.subr.bf16.mxu0 0
    %89 = vmatpush1.bf16.msra.mxu0 0
    %90 = vmatprep.subr.bf16.mxu0 0
    %91 = vmatpush1.bf16.msra.mxu0 0
    %92 = vmatprep.subr.bf16.mxu0 0
    %93 = vmatpush1.bf16.msra.mxu0 0
    %94 = vmatprep.subr.bf16.mxu0 0
    %95 = vmatpush1.bf16.msra.mxu0 0
    %96 = vmatprep.subr.bf16.mxu0 0
    %97 = vmatpush1.bf16.msra.mxu0 0
    %98 = vmatprep.subr.bf16.mxu0 0
    %99 = vmatpush1.bf16.msra.mxu0 0
    %100 = vmatprep.subr.bf16.mxu0 0
    %101 = vmatpush1.bf16.msra.mxu0 0
    %102 = vmatprep.subr.bf16.mxu0 0
    %103 = vmatpush1.bf16.msra.mxu0 0
    %104 = vmatprep.subr.bf16.mxu0 0
    %105 = vmatpush1.bf16.msra.mxu0 0
    %106 = vmatprep.subr.bf16.mxu0 0
    %107 = vmatpush1.bf16.msra.mxu0 0
    %108 = vmatprep.mubr.bf16.mxu0 0
    %109 = vmatmul.mubr.bf16.gmra.mrb[0].mxu0 %v71
    %v110 = vpop.f32.mrb[0].mxu0
    %v111 = vadd.f32 %v33, %v110
    %v112 = vpop.f32.mrb[0].mxu0
    %v113 = vpop.f32.mrb[0].mxu0
    %v114 = vadd.f32 %v33, %v113
    %v115 = vpop.f32.mrb[0].mxu0
    %116 = vmatprep.mubr.bf16.mxu0 0
    %117 = vmatmul.mubr.bf16.gmra.mrb[0].mxu0 %v74
    %v118 = vpop.f32.mrb[0].mxu0
    %v119 = vadd.f32 %v33, %v118
    %v120 = vpop.f32.mrb[0].mxu0
    %v121 = vpop.f32.mrb[0].mxu0
    %v122 = vadd.f32 %v33, %v121
    %v123 = vpop.f32.mrb[0].mxu0
    %124 = vdwg.mxu0
    %vm125 = vcmask 261120
    %126 = vst.msk [vmem:[#allocation2] sm:$0xff] %vm125, %v111
    %127 = vst.msk [vmem:[#allocation2 + $0x8] sm:$0xff] %vm125, %v114
    %128 = vst.msk [vmem:[#allocation2 + $0x10] sm:$0xff] %vm125, %v119
    %129 = vst.msk [vmem:[#allocation2 + $0x18] sm:$0xff] %vm125, %v122
    // Predicated region
    $region14: #{tpu_custom_call.1} parent=1 // pred_check
      _
    $region15: #{tpu_custom_call.1} parent=1 // pred_check_branch
      %131 = sbr.rel (0) target = $region17
    $region16: #{tpu_custom_call.1} parent=1 // pred_region
      %s133 = ssub.s32 512, 512
      %134 = vsyncadd [#allocation3], %s133
      %s135 = sshll.u32 [#allocation2], 4
      %s136 = int_to_ptr.vmem [resolvable:$true] %s135
      %141 = dma.vmem_to_hbm [thread:$0]  %s136, 512, %s3, [#allocation3], 128, 128, 8
    $region17: #{tpu_custom_call.1} parent=1 // pred_fallthru
      _
    // Predicated region
    $region18: #{tpu_custom_call.1} parent=1 // pred_check
      _
    $region19: #{tpu_custom_call.1} parent=1 // pred_check_branch
      %143 = sbr.rel (0) target = $region21
    $region20: #{tpu_custom_call.1} parent=1 // pred_region
      %144 = dma.done [#allocation3], 512
    $region21: #{tpu_custom_call.1} parent=1 // pred_fallthru
      _
    %145 = vsyncpa [#allocation3], 1

</llo_original>
